<compile_context>
chip_gen: v7x
topology: tpu7x:2x2x1
jax: 0.10.0
libtpu: 0.0.40
codegen_flags: <defaults>
</compile_context>

<pallas_src>
import math
import functools

import jax
import jax.numpy as jnp
from jax import lax
from jax.experimental import pallas as pl
from jax.experimental.pallas import tpu as pltpu


def _round_up(x: int, m: int) -> int:
    return ((x + m - 1) // m) * m


# ---------------------------------------------------------------------------
# Kernels
# ---------------------------------------------------------------------------
def _resident_kernel(x_ref, w_ref, o_ref, *, scale, compute_dtype):
    """One M-tile of x against the full VMEM-resident weight.

    x_ref: (tile_m, K)      w_ref: (out_ch, K)      o_ref: (tile_m, out_ch)
    """
    x = x_ref[...]
    w = w_ref[...]
    if compute_dtype is not None:
        x = x.astype(compute_dtype)
        w = w.astype(compute_dtype)
    # Contract x's last dim with w's last dim -> x @ W.T on the MXU, without
    # ever materializing W.T in HBM.
    acc = lax.dot_general(
        x, w,
        dimension_numbers=(((1,), (1,)), ((), ())),
        preferred_element_type=jnp.float32,
    )
    # 1/sqrt(out_ch) is a free VPU multiply hidden under the MXU/memory work.
    o_ref[...] = (acc * scale).astype(o_ref.dtype)


def _tiled_kernel(x_ref, w_ref, o_ref, acc_ref, *, scale, compute_dtype):
    """(M, N, K)-tiled matmul with an f32 accumulator scratch.

    x_ref: (tile_m, tile_k)   w_ref: (tile_n, tile_k)   o_ref: (tile_m, tile_n)
    """
    k = pl.program_id(2)

    @pl.when(k == 0)
    def _():
        acc_ref[...] = jnp.zeros_like(acc_ref)

    x = x_ref[...]
    w = w_ref[...]
    if compute_dtype is not None:
        x = x.astype(compute_dtype)
        w = w.astype(compute_dtype)
    acc_ref[...] += lax.dot_general(
        x, w,
        dimension_numbers=(((1,), (1,)), ((), ())),
        preferred_element_type=jnp.float32,
    )

    @pl.when(k == pl.num_programs(2) - 1)
    def _():
        o_ref[...] = (acc_ref[...] * scale).astype(o_ref.dtype)


# ---------------------------------------------------------------------------
# Wrapper
# ---------------------------------------------------------------------------
def _vmem_budget():
    """(physical VMEM bytes, vmem_limit_bytes to request) for this chip."""
    cap = 64 * 1024 * 1024  # conservative (v7x-sized) fallback
    try:
        info = pltpu.get_tpu_info()
        cap = int(getattr(info, "vmem_capacity_bytes", cap))
    except Exception:
        pass
    # ~48 MiB on 64-MiB parts (v7x), ~96 MiB on 128-MiB parts (v5e/v6e).
    limit = min(cap * 3 // 4, 96 * 1024 * 1024)
    return cap, limit


def embedding_module(
    x,
    weight,
    *,
    compute_dtype=None,      # e.g. jnp.bfloat16 for the MXU-native fast path
    tile_m=None,
    tile_n=256,
    tile_k=512,
    force_pallas=False,
    force_tiled=False,
):
    """Forward of Embedding_module.

    x:       (..., C_in) array.
    weight:  (C_out, C_in) array (PyTorch nn.Linear layout).
    Returns: (..., C_out) = (x @ weight.T) / sqrt(C_out).
    """
    out_ch, in_ch = weight.shape
    assert x.shape[-1] == in_ch
    lead = x.shape[:-1]
    m = int(math.prod(lead)) if lead else 1
    scale = 1.0 / math.sqrt(out_ch)
    out_dtype = x.dtype

    # --- small-problem fallback: pallas_call fixed cost + <5% MXU utilization
    # at these sizes; XLA's fused matmul is strictly faster.
    if not force_pallas and (m < 2048 and in_ch < 256 and out_ch < 1024):
        return (jnp.einsum("...i,oi->...o", x, weight) * scale).astype(out_dtype)

    x2d = x.reshape(m, in_ch)

    vmem_cap, vmem_limit = _vmem_budget()
    if tile_m is None:
        tile_m = 512 if vmem_cap >= 96 * 1024 * 1024 else 256
    # Full-dim blocks are exempt from the (8,128) rule, so never exceed m.
    tile_m_eff = m if m <= tile_m else tile_m

    # Pre-cast the weight once on the host (halves its DMA + VMEM if bf16;
    # for a constant parameter under jit this folds away).  x is cast inside
    # the kernel (a cheap VPU op) to avoid an extra HBM pass over x.
    w_in = weight if compute_dtype is None else weight.astype(compute_dtype)

    x_bytes = jnp.dtype(x2d.dtype).itemsize
    w_bytes = jnp.dtype(w_in.dtype).itemsize
    o_bytes = jnp.dtype(out_dtype).itemsize
    headroom = 4 * 1024 * 1024

    buffered_cls = getattr(pl, "Buffered", None)
    w_copies = 1 if buffered_cls is not None else 2
    resident_bytes = (
        w_copies * out_ch * in_ch * w_bytes
        + 2 * tile_m_eff * in_ch * x_bytes
        + 2 * tile_m_eff * out_ch * o_bytes
    )

    common_params = dict(vmem_limit_bytes=vmem_limit)

    # ------------------------------------------------------------------ A ---
    # Weight fully VMEM-resident: loaded once, grid only over M.
    if not force_tiled and resident_bytes + headroom <= vmem_limit:
        kern = functools.partial(
            _resident_kernel, scale=scale, compute_dtype=compute_dtype)

        def run_resident(w_pipeline_mode):
            w_kwargs = {}
            if w_pipeline_mode is not None:
                w_kwargs["pipeline_mode"] = w_pipeline_mode
            return pl.pallas_call(
                kern,
                out_shape=jax.ShapeDtypeStruct((m, out_ch), out_dtype),
                grid_spec=pltpu.PrefetchScalarGridSpec(
                    num_scalar_prefetch=0,
                    grid=(pl.cdiv(m, tile_m_eff),),
                    in_specs=[
                        # rows tile: full K (exempt from 128 rule), ragged last
                        # block clipped on store.
                        pl.BlockSpec((tile_m_eff, in_ch), lambda i: (i, 0)),
                        # whole weight, constant block index -> one DMA total.
                        pl.BlockSpec((out_ch, in_ch), lambda i: (0, 0), **w_kwargs),
                    ],
                    out_specs=pl.BlockSpec((tile_m_eff, out_ch), lambda i: (i, 0)),
                ),
                compiler_params=pltpu.CompilerParams(
                    dimension_semantics=("parallel",), **common_params),
            )(x2d, w_in)

        if buffered_cls is not None:
            try:
                # Constant block -> single-buffer it (halves weight VMEM, v7x).
                out2d = run_resident(buffered_cls(1))
            except Exception:
                out2d = run_resident(None)
        else:
            out2d = run_resident(None)
        return out2d.reshape(*lead, out_ch)

    # ------------------------------------------------------------------ B ---
    # Weight too big for VMEM: standard (M, N, K) tiling with an f32
    # accumulator scratch; K zero-padded only when it is actually tiled.
    tile_n_eff = out_ch if out_ch <= tile_n else tile_n          # mult of 128
    if in_ch <= 2048:
        tile_k_eff = in_ch                                       # full dim
        k_pad = in_ch
        x_in, w_t = x2d, w_in
    else:
        tile_k_eff = tile_k                                       # mult of 128
        k_pad = _round_up(in_ch, tile_k_eff)
        # Zero-pad the contraction dim (correctness: no garbage enters the dot).
        x_in = jnp.pad(x2d, ((0, 0), (0, k_pad - in_ch)))
        w_t = jnp.pad(w_in, ((0, 0), (0, k_pad - in_ch)))

    grid = (pl.cdiv(m, tile_m_eff), pl.cdiv(out_ch, tile_n_eff), k_pad // tile_k_eff)

    out2d = pl.pallas_call(
        functools.partial(_tiled_kernel, scale=scale, compute_dtype=compute_dtype),
        out_shape=jax.ShapeDtypeStruct((m, out_ch), out_dtype),
        grid_spec=pltpu.PrefetchScalarGridSpec(
            num_scalar_prefetch=0,
            grid=grid,
            in_specs=[
                pl.BlockSpec((tile_m_eff, tile_k_eff), lambda i, j, k: (i, k)),
                pl.BlockSpec((tile_n_eff, tile_k_eff), lambda i, j, k: (j, k)),
            ],
            out_specs=pl.BlockSpec((tile_m_eff, tile_n_eff), lambda i, j, k: (i, j)),
            scratch_shapes=[pltpu.VMEM((tile_m_eff, tile_n_eff), jnp.float32)],
        ),
        compiler_params=pltpu.CompilerParams(
            dimension_semantics=("parallel", "parallel", "arbitrary"),
            **common_params),
    )(x_in, w_t)

    return out2d.reshape(*lead, out_ch)


def embedding_module_ref(x, weight):
    out_ch = weight.shape[0]
    return jnp.einsum("...i,oi->...o", x, weight) / math.sqrt(out_ch)


if __name__ == "__main__":
    key = jax.random.PRNGKey(0)
    kx, kw = jax.random.split(key)

    # Small shapes consistent with the module: batch=2, time=8, joints=16,
    # in_channels=32, out_channels=64  (Linear acts on the last dim).
    B, T, V, C_in, C_out = 2, 8, 16, 32, 64
    x = jax.random.normal(kx, (B, T, V, C_in), dtype=jnp.float32)
    bound = 1.0 / math.sqrt(C_in)  # nn.Linear default kaiming-uniform scale
    weight = jax.random.uniform(
        kw, (C_out, C_in), dtype=jnp.float32, minval=-bound, maxval=bound)

    y_ref = embedding_module_ref(x, weight)

    # Weight-resident Pallas path (forced; the auto-dispatcher would route this
    # tiny problem to XLA einsum).  Exact f32 semantics of the module.
    y = jax.block_until_ready(embedding_module(x, weight, force_pallas=True))
    assert y.shape == (B, T, V, C_out)
    assert jnp.allclose(y, y_ref, atol=2e-5, rtol=2e-5)

    # bf16-operand / f32-accumulate fast path (preferred on v6e/v7x MXUs).
    y_bf16 = jax.block_until_ready(
        embedding_module(x, weight, compute_dtype=jnp.bfloat16, force_pallas=True))
    assert y_bf16.shape == (B, T, V, C_out)
    assert jnp.allclose(y_bf16, y_ref, atol=2e-2, rtol=2e-2)

    # (M, N, K)-tiled accumulator path (used when the weight exceeds VMEM),
    # exercised here at small size for correctness.
    y_tiled = jax.block_until_ready(
        embedding_module(x, weight, force_pallas=True, force_tiled=True, tile_m=128))
    assert jnp.allclose(y_tiled, y_ref, atol=2e-5, rtol=2e-5)

    # Auto-dispatch (small-problem einsum fallback) — same numbers.
    y_auto = jax.block_until_ready(embedding_module(x, weight))
    assert jnp.allclose(y_auto, y_ref, atol=2e-5, rtol=2e-5)

    print("KERNEL_OK")
</pallas_src>

<mosaic_0001>
module attributes {stable_mosaic.version = 11 : i64} {
  func.func @_resident_kernel(%arg0: i32, %arg1: memref<256x32xf32, #tpu.memory_space<vmem>>, %arg2: memref<64x32xf32, #tpu.memory_space<vmem>>, %arg3: memref<256x64xf32, #tpu.memory_space<vmem>>) attributes {dimension_semantics = [#tpu.dimension_semantics<parallel>], iteration_bounds = array<i64: 1>, scalar_prefetch = 0 : i64, scratch_operands = 0 : i64, tpu.core_type = #tpu.core_type<tc>, window_params = [{transform_indices = @transform_0, window_bounds = array<i64: 256, 32>}, {pipeline_mode = #tpu.pipeline_mode<synchronous>, transform_indices = @transform_1, window_bounds = array<i64: 64, 32>}, {transform_indices = @transform_2, window_bounds = array<i64: 256, 64>}]} {
    %c0 = arith.constant 0 : index
    %c0_0 = arith.constant 0 : index
    %0 = vector.load %arg1[%c0, %c0_0] : memref<256x32xf32, #tpu.memory_space<vmem>>, vector<256x32xf32>
    %c0_1 = arith.constant 0 : index
    %c0_2 = arith.constant 0 : index
    %1 = vector.load %arg2[%c0_1, %c0_2] : memref<64x32xf32, #tpu.memory_space<vmem>>, vector<64x32xf32>
    %cst = arith.constant dense<0.000000e+00> : vector<256x64xf32>
    %2 = tpu.matmul %0, %1, %cst {dimension_numbers = #tpu.dot_dimension_numbers<[1], [1], [0], [0], [0, 0, 1, 0], [], []>} : vector<256x32xf32>, vector<64x32xf32>, vector<256x64xf32> -> vector<256x64xf32>
    %cst_3 = arith.constant 1.250000e-01 : f32
    %3 = vector.broadcast %cst_3 : f32 to vector<256x64xf32>
    %4 = arith.mulf %2, %3 : vector<256x64xf32>
    %c0_4 = arith.constant 0 : index
    %c0_5 = arith.constant 0 : index
    %5 = vector.load %arg3[%c0_4, %c0_5] : memref<256x64xf32, #tpu.memory_space<vmem>>, vector<256x64xf32>
    tpu.vector_store %arg3[%c0_4, %c0_5], %4 {strides = array<i32>} : memref<256x64xf32, #tpu.memory_space<vmem>>, vector<256x64xf32>,
    return
  }
  func.func @transform_0(%arg0: i32) -> (i32, i32) {
    %c0_i32 = arith.constant 0 : i32
    %c0_i32_0 = arith.constant 0 : i32
    return %arg0, %c0_i32 : i32, i32
  }
  func.func @transform_1(%arg0: i32) -> (i32, i32) {
    %c0_i32 = arith.constant 0 : i32
    %c0_i32_0 = arith.constant 0 : i32
    %c0_i32_1 = arith.constant 0 : i32
    return %c0_i32, %c0_i32_0 : i32, i32
  }
  func.func @transform_2(%arg0: i32) -> (i32, i32) {
    %c0_i32 = arith.constant 0 : i32
    %c0_i32_0 = arith.constant 0 : i32
    return %arg0, %c0_i32 : i32, i32
  }
}

module attributes {stable_mosaic.version = 11 : i64} {
  func.func @_resident_kernel(%arg0: i32, %arg1: memref<256x32xf32, #tpu.memory_space<vmem>>, %arg2: memref<64x32xf32, #tpu.memory_space<vmem>>, %arg3: memref<256x64xf32, #tpu.memory_space<vmem>>) attributes {dimension_semantics = [#tpu.dimension_semantics<parallel>], iteration_bounds = array<i64: 1>, scalar_prefetch = 0 : i64, scratch_operands = 0 : i64, tpu.core_type = #tpu.core_type<tc>, window_params = [{transform_indices = @transform_0, window_bounds = array<i64: 256, 32>}, {pipeline_mode = #tpu.pipeline_mode<synchronous>, transform_indices = @transform_1, window_bounds = array<i64: 64, 32>}, {transform_indices = @transform_2, window_bounds = array<i64: 256, 64>}]} {
    %c0 = arith.constant 0 : index
    %c0_0 = arith.constant 0 : index
    %0 = vector.load %arg1[%c0, %c0_0] : memref<256x32xf32, #tpu.memory_space<vmem>>, vector<256x32xf32>
    %c0_1 = arith.constant 0 : index
    %c0_2 = arith.constant 0 : index
    %1 = vector.load %arg2[%c0_1, %c0_2] : memref<64x32xf32, #tpu.memory_space<vmem>>, vector<64x32xf32>
    %cst = arith.constant dense<0.000000e+00> : vector<256x64xf32>
    %2 = tpu.matmul %0, %1, %cst {dimension_numbers = #tpu.dot_dimension_numbers<[1], [1], [0], [0], [0, 0, 1, 0], [], []>} : vector<256x32xf32>, vector<64x32xf32>, vector<256x64xf32> -> vector<256x64xf32>
    %cst_3 = arith.constant 1.250000e-01 : f32
    %3 = vector.broadcast %cst_3 : f32 to vector<256x64xf32>
    %4 = arith.mulf %2, %3 : vector<256x64xf32>
    %c0_4 = arith.constant 0 : index
    %c0_5 = arith.constant 0 : index
    %5 = vector.load %arg3[%c0_4, %c0_5] : memref<256x64xf32, #tpu.memory_space<vmem>>, vector<256x64xf32>
    tpu.vector_store %arg3[%c0_4, %c0_5], %4 {strides = array<i32>} : memref<256x64xf32, #tpu.memory_space<vmem>>, vector<256x64xf32>,
    return
  }
  func.func @transform_0(%arg0: i32) -> (i32, i32) {
    %c0_i32 = arith.constant 0 : i32
    %c0_i32_0 = arith.constant 0 : i32
    return %arg0, %c0_i32 : i32, i32
  }
  func.func @transform_1(%arg0: i32) -> (i32, i32) {
    %c0_i32 = arith.constant 0 : i32
    %c0_i32_0 = arith.constant 0 : i32
    %c0_i32_1 = arith.constant 0 : i32
    return %c0_i32, %c0_i32_0 : i32, i32
  }
  func.func @transform_2(%arg0: i32) -> (i32, i32) {
    %c0_i32 = arith.constant 0 : i32
    %c0_i32_0 = arith.constant 0 : i32
    return %arg0, %c0_i32 : i32, i32
  }
}

</mosaic_0001>

<llo_original>
// kernel: tpu_custom_call.1
$region0: #{tpu_custom_call.1}
  #allocation0 [shape = 'u32[]', space=smem, size = 0x4, offset = 0x4, fixed_abs, tag = 'smem constant byte address 0x4 - core index']
  #allocation1 [shape = 'u32[144,128]{1,0:T(1,128)}', space=vmem, size = 0x12000, scoped, tag = 'internal scratch']
  %s0 = inlined_call_operand.vmem [shape: f32[256,32], index: 0, kind: input, shape index: {}]
  %s1 = inlined_call_operand.vmem [shape: f32[64,32], index: 1, kind: input, shape index: {}]
  %s2 = inlined_call_operand.vmem [shape: f32[256,64], index: 2, kind: output, shape index: {}]
  %s3 = sld [smem:[#allocation0]]
  $region18: #{tpu_custom_call.1} parent=0
    _
  %s5 = ssub.s32 1, %s3
  %s6 = scalar_select 0, %s5, %s3
  // Predicated region
  $region2: #{tpu_custom_call.1} parent=0 // pred_check
    _
  $region3: #{tpu_custom_call.1} parent=0 // pred_check_branch
    %8 = sbr.rel (0) target = $region5
  $region4: #{tpu_custom_call.1} parent=0 // pred_region
    _
  $region5: #{tpu_custom_call.1} parent=0 // pred_fallthru
    _
  // Predicated region
  $region6: #{tpu_custom_call.1} parent=0 // pred_check
    _
  $region7: #{tpu_custom_call.1} parent=0 // pred_check_branch
    %10 = sbr.rel (0) target = $region9
  $region8: #{tpu_custom_call.1} parent=0 // pred_region
    _
  $region9: #{tpu_custom_call.1} parent=0 // pred_fallthru
    _
  %v11 = vld [vmem:[%s0] sm:$0xff]
  %v12 = vld [vmem:[%s0 + $0x8] sm:$0xff]
  %v13 = vld [vmem:[%s0 + $0x10] sm:$0xff]
  %v14 = vld [vmem:[%s0 + $0x18] sm:$0xff]
  %v15 = vld [vmem:[%s0 + $0x20] sm:$0xff]
  %v16 = vld [vmem:[%s0 + $0x28] sm:$0xff]
  %v17 = vld [vmem:[%s0 + $0x30] sm:$0xff]
  %v18 = vld [vmem:[%s0 + $0x38] sm:$0xff]
  %v19 = vld [vmem:[%s0 + $0x40] sm:$0xff]
  %v20 = vld [vmem:[%s0 + $0x48] sm:$0xff]
  %v21 = vld [vmem:[%s0 + $0x50] sm:$0xff]
  %v22 = vld [vmem:[%s0 + $0x58] sm:$0xff]
  %v23 = vld [vmem:[%s0 + $0x60] sm:$0xff]
  %v24 = vld [vmem:[%s0 + $0x68] sm:$0xff]
  %v25 = vld [vmem:[%s0 + $0x70] sm:$0xff]
  %v26 = vld [vmem:[%s0 + $0x78] sm:$0xff]
  %v27 = vld [vmem:[%s0 + $0x80] sm:$0xff]
  %v28 = vld [vmem:[%s0 + $0x88] sm:$0xff]
  %v29 = vld [vmem:[%s0 + $0x90] sm:$0xff]
  %v30 = vld [vmem:[%s0 + $0x98] sm:$0xff]
  %v31 = vld [vmem:[%s0 + $0xa0] sm:$0xff]
  %v32 = vld [vmem:[%s0 + $0xa8] sm:$0xff]
  %v33 = vld [vmem:[%s0 + $0xb0] sm:$0xff]
  %v34 = vld [vmem:[%s0 + $0xb8] sm:$0xff]
  %v35 = vld [vmem:[%s0 + $0xc0] sm:$0xff]
  %v36 = vld [vmem:[%s0 + $0xc8] sm:$0xff]
  %v37 = vld [vmem:[%s0 + $0xd0] sm:$0xff]
  %v38 = vld [vmem:[%s0 + $0xd8] sm:$0xff]
  %v39 = vld [vmem:[%s0 + $0xe0] sm:$0xff]
  %v40 = vld [vmem:[%s0 + $0xe8] sm:$0xff]
  %v41 = vld [vmem:[%s0 + $0xf0] sm:$0xff]
  %v42 = vld [vmem:[%s0 + $0xf8] sm:$0xff]
  %v43 = vld [vmem:[%s1] sm:$0xff]
  %v44 = vld [vmem:[%s1 + $0x8] sm:$0xff]
  %v45 = vld [vmem:[%s1 + $0x10] sm:$0xff]
  %v46 = vld [vmem:[%s1 + $0x18] sm:$0xff]
  %v47 = vld [vmem:[%s1 + $0x20] sm:$0xff]
  %v48 = vld [vmem:[%s1 + $0x28] sm:$0xff]
  %v49 = vld [vmem:[%s1 + $0x30] sm:$0xff]
  %v50 = vld [vmem:[%s1 + $0x38] sm:$0xff]
  %vm51 = vcmask 261120
  %v53 = vsel %vm51, %v11, 0
  %v56 = vsel %vm51, %v12, 0
  %v59 = vsel %vm51, %v13, 0
  %v62 = vsel %vm51, %v14, 0
  %v65 = vsel %vm51, %v15, 0
  %v68 = vsel %vm51, %v16, 0
  %v71 = vsel %vm51, %v17, 0
  %v74 = vsel %vm51, %v18, 0
  %v77 = vsel %vm51, %v19, 0
  %v80 = vsel %vm51, %v20, 0
  %v83 = vsel %vm51, %v21, 0
  %v86 = vsel %vm51, %v22, 0
  %v89 = vsel %vm51, %v23, 0
  %v92 = vsel %vm51, %v24, 0
  %v95 = vsel %vm51, %v25, 0
  %v98 = vsel %vm51, %v26, 0
  %v101 = vsel %vm51, %v27, 0
  %v104 = vsel %vm51, %v28, 0
  %v107 = vsel %vm51, %v29, 0
  %v110 = vsel %vm51, %v30, 0
  %v113 = vsel %vm51, %v31, 0
  %v116 = vsel %vm51, %v32, 0
  %v119 = vsel %vm51, %v33, 0
  %v122 = vsel %vm51, %v34, 0
  %v125 = vsel %vm51, %v35, 0
  %v128 = vsel %vm51, %v36, 0
  %v131 = vsel %vm51, %v37, 0
  %v134 = vsel %vm51, %v38, 0
  %v137 = vsel %vm51, %v39, 0
  %v140 = vsel %vm51, %v40, 0
  %v143 = vsel %vm51, %v41, 0
  %v146 = vsel %vm51, %v42, 0
  %v149 = vsel %vm51, %v43, 0
  %v152 = vsel %vm51, %v44, 0
  %v155 = vsel %vm51, %v45, 0
  %v158 = vsel %vm51, %v46, 0
  %v161 = vsel %vm51, %v47, 0
  %v164 = vsel %vm51, %v48, 0
  %v167 = vsel %vm51, %v49, 0
  %v170 = vsel %vm51, %v50, 0
  %172 = vmatprep.subr.mxu0 0.0
  %173 = vmatpush1.xpose.msra.mxu0 %v149
  %174 = vmatprep.subr.mxu0 0.0
  %175 = vmatpush1.xpose.msra.mxu0 %v152
  %176 = vmatprep.subr.mxu0 0.0
  %177 = vmatpush1.xpose.msra.mxu0 %v155
  %178 = vmatprep.subr.mxu0 0.0
  %179 = vmatpush1.xpose.msra.mxu0 %v158
  %180 = vmatprep.subr.mxu0 0.0
  %181 = vmatpush1.xpose.msra.mxu0 %v161
  %182 = vmatprep.subr.mxu0 0.0
  %183 = vmatpush1.xpose.msra.mxu0 %v164
  %184 = vmatprep.subr.mxu0 0.0
  %185 = vmatpush1.xpose.msra.mxu0 %v167
  %186 = vmatprep.subr.mxu0 0.0
  %187 = vmatpush1.xpose.msra.mxu0 %v170
  %188 = vmatprep.subr.mxu0 0.0
  %189 = vmatpush1.xpose.msra.mxu0 0.0
  %190 = vmatprep.subr.mxu0 0.0
  %191 = vmatpush1.xpose.msra.mxu0 0.0
  %192 = vmatprep.subr.mxu0 0.0
  %193 = vmatpush1.xpose.msra.mxu0 0.0
  %194 = vmatprep.subr.mxu0 0.0
  %195 = vmatpush1.xpose.msra.mxu0 0.0
  %196 = vmatprep.subr.mxu0 0.0
  %197 = vmatpush1.xpose.msra.mxu0 0.0
  %198 = vmatprep.subr.mxu0 0.0
  %199 = vmatpush1.xpose.msra.mxu0 0.0
  %200 = vmatprep.subr.mxu0 0.0
  %201 = vmatpush1.xpose.msra.mxu0 0.0
  %202 = vmatprep.subr.mxu0 0.0
  %203 = vmatpush1.xpose.msra.mxu0 0.0
  %204 = vmatprep.subr.mxu0 0.0
  %205 = vmatpush1.xpose.msra.mxu0 0.0
  %206 = vmatprep.subr.mxu0 0.0
  %207 = vmatpush1.xpose.msra.mxu0 0.0
  %208 = vmatprep.subr.mxu0 0.0
  %209 = vmatpush1.xpose.msra.mxu0 0.0
  %210 = vmatprep.subr.mxu0 0.0
  %211 = vmatpush1.xpose.msra.mxu0 0.0
  %212 = vmatprep.subr.mxu0 0.0
  %213 = vmatpush1.xpose.msra.mxu0 0.0
  %214 = vmatprep.subr.mxu0 0.0
  %215 = vmatpush1.xpose.msra.mxu0 0.0
  %216 = vmatprep.subr.mxu0 0.0
  %217 = vmatpush1.xpose.msra.mxu0 0.0
  %218 = vmatprep.subr.mxu0 0.0
  %219 = vmatpush1.xpose.msra.mxu0 0.0
  %220 = vmatprep.subr.mxu0 0.0
  %221 = vmatpush1.xpose.msra.mxu0 0.0
  %222 = vmatprep.subr.mxu0 0.0
  %223 = vmatpush1.xpose.msra.mxu0 0.0
  %224 = vmatprep.subr.mxu0 0.0
  %225 = vmatpush1.xpose.msra.mxu0 0.0
  %226 = vmatprep.subr.mxu0 0.0
  %227 = vmatpush1.xpose.msra.mxu0 0.0
  %228 = vmatprep.subr.mxu0 0.0
  %229 = vmatpush1.xpose.msra.mxu0 0.0
  %230 = vmatprep.subr.mxu0 0.0
  %231 = vmatpush1.xpose.msra.mxu0 0.0
  %232 = vmatprep.subr.mxu0 0.0
  %233 = vmatpush1.xpose.msra.mxu0 0.0
  %234 = vmatprep.subr.mxu0 0.0
  %235 = vmatpush1.xpose.msra.mxu0 0.0
  %236 = vmatprep.mubr.f32.mxu0 0.0
  %237 = vmatmul.mubr.f32.gmra.mrb[0].mxu0 %v53
  %v238 = vpop.f32.mrb[0].mxu0
  %v239 = vadd.f32 0.0, %v238
  %v240 = vpop.f32.mrb[0].mxu0
  %241 = vmatprep.mubr.f32.mxu0 0.0
  %242 = vmatmul.mubr.f32.gmra.mrb[0].mxu0 %v56
  %v243 = vpop.f32.mrb[0].mxu0
  %v244 = vadd.f32 0.0, %v243
  %v245 = vpop.f32.mrb[0].mxu0
  %246 = vmatprep.mubr.f32.mxu0 0.0
  %247 = vmatmul.mubr.f32.gmra.mrb[0].mxu0 %v59
  %v248 = vpop.f32.mrb[0].mxu0
  %v249 = vadd.f32 0.0, %v248
  %v250 = vpop.f32.mrb[0].mxu0
  %251 = vmatprep.mubr.f32.mxu0 0.0
  %252 = vmatmul.mubr.f32.gmra.mrb[0].mxu0 %v62
  %v253 = vpop.f32.mrb[0].mxu0
  %v254 = vadd.f32 0.0, %v253
  %v255 = vpop.f32.mrb[0].mxu0
  %256 = vmatprep.mubr.f32.mxu0 0.0
  %257 = vmatmul.mubr.f32.gmra.mrb[0].mxu0 %v65
  %v258 = vpop.f32.mrb[0].mxu0
  %v259 = vadd.f32 0.0, %v258
  %v260 = vpop.f32.mrb[0].mxu0
  %261 = vmatprep.mubr.f32.mxu0 0.0
  %262 = vmatmul.mubr.f32.gmra.mrb[0].mxu0 %v68
  %v263 = vpop.f32.mrb[0].mxu0
  %v264 = vadd.f32 0.0, %v263
  %v265 = vpop.f32.mrb[0].mxu0
  %266 = vmatprep.mubr.f32.mxu0 0.0
  %267 = vmatmul.mubr.f32.gmra.mrb[0].mxu0 %v71
  %v268 = vpop.f32.mrb[0].mxu0
  %v269 = vadd.f32 0.0, %v268
  %v270 = vpop.f32.mrb[0].mxu0
  %271 = vmatprep.mubr.f32.mxu0 0.0
  %272 = vmatmul.mubr.f32.gmra.mrb[0].mxu0 %v74
  %v273 = vpop.f32.mrb[0].mxu0
  %v274 = vadd.f32 0.0, %v273
  %v275 = vpop.f32.mrb[0].mxu0
  %276 = vmatprep.mubr.f32.mxu0 0.0
  %277 = vmatmul.mubr.f32.gmra.mrb[0].mxu0 %v77
  %v278 = vpop.f32.mrb[0].mxu0
  %v279 = vadd.f32 0.0, %v278
  %v280 = vpop.f32.mrb[0].mxu0
  %281 = vmatprep.mubr.f32.mxu0 0.0
  %282 = vmatmul.mubr.f32.gmra.mrb[0].mxu0 %v80
  %v283 = vpop.f32.mrb[0].mxu0
  %v284 = vadd.f32 0.0, %v283
  %v285 = vpop.f32.mrb[0].mxu0
  %286 = vmatprep.mubr.f32.mxu0 0.0
  %287 = vmatmul.mubr.f32.gmra.mrb[0].mxu0 %v83
  %v288 = vpop.f32.mrb[0].mxu0
  %v289 = vadd.f32 0.0, %v288
  %v290 = vpop.f32.mrb[0].mxu0
  %291 = vmatprep.mubr.f32.mxu0 0.0
  %292 = vmatmul.mubr.f32.gmra.mrb[0].mxu0 %v86
  %v293 = vpop.f32.mrb[0].mxu0
  %v294 = vadd.f32 0.0, %v293
  %v295 = vpop.f32.mrb[0].mxu0
  %296 = vmatprep.mubr.f32.mxu0 0.0
  %297 = vmatmul.mubr.f32.gmra.mrb[0].mxu0 %v89
  %v298 = vpop.f32.mrb[0].mxu0
  %v299 = vadd.f32 0.0, %v298
  %v300 = vpop.f32.mrb[0].mxu0
  %301 = vmatprep.mubr.f32.mxu0 0.0
  %302 = vmatmul.mubr.f32.gmra.mrb[0].mxu0 %v92
  %v303 = vpop.f32.mrb[0].mxu0
  %v304 = vadd.f32 0.0, %v303
  %v305 = vpop.f32.mrb[0].mxu0
  %306 = vmatprep.mubr.f32.mxu0 0.0
  %307 = vmatmul.mubr.f32.gmra.mrb[0].mxu0 %v95
  %v308 = vpop.f32.mrb[0].mxu0
  %v309 = vadd.f32 0.0, %v308
  %v310 = vpop.f32.mrb[0].mxu0
  %311 = vmatprep.mubr.f32.mxu0 0.0
  %312 = vmatmul.mubr.f32.gmra.mrb[0].mxu0 %v98
  %v313 = vpop.f32.mrb[0].mxu0
  %v314 = vadd.f32 0.0, %v313
  %v315 = vpop.f32.mrb[0].mxu0
  %316 = vmatprep.mubr.f32.mxu0 0.0
  %317 = vmatmul.mubr.f32.gmra.mrb[0].mxu0 %v101
  %v318 = vpop.f32.mrb[0].mxu0
  %v319 = vadd.f32 0.0, %v318
  %v320 = vpop.f32.mrb[0].mxu0
  %321 = vmatprep.mubr.f32.mxu0 0.0
  %322 = vmatmul.mubr.f32.gmra.mrb[0].mxu0 %v104
  %v323 = vpop.f32.mrb[0].mxu0
  %v324 = vadd.f32 0.0, %v323
  %v325 = vpop.f32.mrb[0].mxu0
  %326 = vmatprep.mubr.f32.mxu0 0.0
  %327 = vmatmul.mubr.f32.gmra.mrb[0].mxu0 %v107
  %v328 = vpop.f32.mrb[0].mxu0
  %v329 = vadd.f32 0.0, %v328
  %v330 = vpop.f32.mrb[0].mxu0
  %331 = vmatprep.mubr.f32.mxu0 0.0
  %332 = vmatmul.mubr.f32.gmra.mrb[0].mxu0 %v110
  %v333 = vpop.f32.mrb[0].mxu0
  %v334 = vadd.f32 0.0, %v333
  %v335 = vpop.f32.mrb[0].mxu0
  %336 = vmatprep.mubr.f32.mxu0 0.0
  %337 = vmatmul.mubr.f32.gmra.mrb[0].mxu0 %v113
  %v338 = vpop.f32.mrb[0].mxu0
  %v339 = vadd.f32 0.0, %v338
  %v340 = vpop.f32.mrb[0].mxu0
  %341 = vmatprep.mubr.f32.mxu0 0.0
  %342 = vmatmul.mubr.f32.gmra.mrb[0].mxu0 %v116
  %v343 = vpop.f32.mrb[0].mxu0
  %v344 = vadd.f32 0.0, %v343
  %v345 = vpop.f32.mrb[0].mxu0
  %346 = vmatprep.mubr.f32.mxu0 0.0
  %347 = vmatmul.mubr.f32.gmra.mrb[0].mxu0 %v119
  %v348 = vpop.f32.mrb[0].mxu0
  %v349 = vadd.f32 0.0, %v348
  %v350 = vpop.f32.mrb[0].mxu0
  %351 = vmatprep.mubr.f32.mxu0 0.0
  %352 = vmatmul.mubr.f32.gmra.mrb[0].mxu0 %v122
  %v353 = vpop.f32.mrb[0].mxu0
  %v354 = vadd.f32 0.0, %v353
  %v355 = vpop.f32.mrb[0].mxu0
  %356 = vmatprep.mubr.f32.mxu0 0.0
  %357 = vmatmul.mubr.f32.gmra.mrb[0].mxu0 %v125
  %v358 = vpop.f32.mrb[0].mxu0
  %v359 = vadd.f32 0.0, %v358
  %v360 = vpop.f32.mrb[0].mxu0
  %361 = vmatprep.mubr.f32.mxu0 0.0
  %362 = vmatmul.mubr.f32.gmra.mrb[0].mxu0 %v128
  %v363 = vpop.f32.mrb[0].mxu0
  %v364 = vadd.f32 0.0, %v363
  %v365 = vpop.f32.mrb[0].mxu0
  %366 = vmatprep.mubr.f32.mxu0 0.0
  %367 = vmatmul.mubr.f32.gmra.mrb[0].mxu0 %v131
  %v368 = vpop.f32.mrb[0].mxu0
  %v369 = vadd.f32 0.0, %v368
  %v370 = vpop.f32.mrb[0].mxu0
  %371 = vmatprep.mubr.f32.mxu0 0.0
  %372 = vmatmul.mubr.f32.gmra.mrb[0].mxu0 %v134
  %v373 = vpop.f32.mrb[0].mxu0
  %v374 = vadd.f32 0.0, %v373
  %v375 = vpop.f32.mrb[0].mxu0
  %376 = vmatprep.mubr.f32.mxu0 0.0
  %377 = vmatmul.mubr.f32.gmra.mrb[0].mxu0 %v137
  %v378 = vpop.f32.mrb[0].mxu0
  %v379 = vadd.f32 0.0, %v378
  %v380 = vpop.f32.mrb[0].mxu0
  %381 = vmatprep.mubr.f32.mxu0 0.0
  %382 = vmatmul.mubr.f32.gmra.mrb[0].mxu0 %v140
  %v383 = vpop.f32.mrb[0].mxu0
  %v384 = vadd.f32 0.0, %v383
  %v385 = vpop.f32.mrb[0].mxu0
  %386 = vmatprep.mubr.f32.mxu0 0.0
  %387 = vmatmul.mubr.f32.gmra.mrb[0].mxu0 %v143
  %v388 = vpop.f32.mrb[0].mxu0
  %v389 = vadd.f32 0.0, %v388
  %v390 = vpop.f32.mrb[0].mxu0
  %391 = vmatprep.mubr.f32.mxu0 0.0
  %392 = vmatmul.mubr.f32.gmra.mrb[0].mxu0 %v146
  %v393 = vpop.f32.mrb[0].mxu0
  %v394 = vadd.f32 0.0, %v393
  %v395 = vpop.f32.mrb[0].mxu0
  %396 = vdwg.mxu0
  %v397 = vmul.f32 %v239, 0.125
  %v398 = vmul.f32 %v244, 0.125
  %v399 = vmul.f32 %v249, 0.125
  %v400 = vmul.f32 %v254, 0.125
  %v401 = vmul.f32 %v259, 0.125
  %v402 = vmul.f32 %v264, 0.125
  %v403 = vmul.f32 %v269, 0.125
  %v404 = vmul.f32 %v274, 0.125
  %v405 = vmul.f32 %v279, 0.125
  %v406 = vmul.f32 %v284, 0.125
  %v407 = vmul.f32 %v289, 0.125
  %v408 = vmul.f32 %v294, 0.125
  %v409 = vmul.f32 %v299, 0.125
  %v410 = vmul.f32 %v304, 0.125
  %v411 = vmul.f32 %v309, 0.125
  %v412 = vmul.f32 %v314, 0.125
  %v413 = vmul.f32 %v319, 0.125
  %v414 = vmul.f32 %v324, 0.125
  %v415 = vmul.f32 %v329, 0.125
  %v416 = vmul.f32 %v334, 0.125
  %v417 = vmul.f32 %v339, 0.125
  %v418 = vmul.f32 %v344, 0.125
  %v419 = vmul.f32 %v349, 0.125
  %v420 = vmul.f32 %v354, 0.125
  %v421 = vmul.f32 %v359, 0.125
  %v422 = vmul.f32 %v364, 0.125
  %v423 = vmul.f32 %v369, 0.125
  %v424 = vmul.f32 %v374, 0.125
  %v425 = vmul.f32 %v379, 0.125
  %v426 = vmul.f32 %v384, 0.125
  %v427 = vmul.f32 %v389, 0.125
  %v428 = vmul.f32 %v394, 0.125
  %vm429 = vcmask 523264
  %430 = vst.msk [vmem:[%s2] sm:$0xff] %vm429, %v397
  %431 = vst.msk [vmem:[%s2 + $0x8] sm:$0xff] %vm429, %v398
  %432 = vst.msk [vmem:[%s2 + $0x10] sm:$0xff] %vm429, %v399
  %433 = vst.msk [vmem:[%s2 + $0x18] sm:$0xff] %vm429, %v400
  %434 = vst.msk [vmem:[%s2 + $0x20] sm:$0xff] %vm429, %v401
  %435 = vst.msk [vmem:[%s2 + $0x28] sm:$0xff] %vm429, %v402
  %436 = vst.msk [vmem:[%s2 + $0x30] sm:$0xff] %vm429, %v403
  %437 = vst.msk [vmem:[%s2 + $0x38] sm:$0xff] %vm429, %v404
  %438 = vst.msk [vmem:[%s2 + $0x40] sm:$0xff] %vm429, %v405
  %439 = vst.msk [vmem:[%s2 + $0x48] sm:$0xff] %vm429, %v406
  %440 = vst.msk [vmem:[%s2 + $0x50] sm:$0xff] %vm429, %v407
  %441 = vst.msk [vmem:[%s2 + $0x58] sm:$0xff] %vm429, %v408
  %442 = vst.msk [vmem:[%s2 + $0x60] sm:$0xff] %vm429, %v409
  %443 = vst.msk [vmem:[%s2 + $0x68] sm:$0xff] %vm429, %v410
  %444 = vst.msk [vmem:[%s2 + $0x70] sm:$0xff] %vm429, %v411
  %445 = vst.msk [vmem:[%s2 + $0x78] sm:$0xff] %vm429, %v412
  %446 = vst.msk [vmem:[%s2 + $0x80] sm:$0xff] %vm429, %v413
  %447 = vst.msk [vmem:[%s2 + $0x88] sm:$0xff] %vm429, %v414
  %448 = vst.msk [vmem:[%s2 + $0x90] sm:$0xff] %vm429, %v415
  %449 = vst.msk [vmem:[%s2 + $0x98] sm:$0xff] %vm429, %v416
  %450 = vst.msk [vmem:[%s2 + $0xa0] sm:$0xff] %vm429, %v417
  %451 = vst.msk [vmem:[%s2 + $0xa8] sm:$0xff] %vm429, %v418
  %452 = vst.msk [vmem:[%s2 + $0xb0] sm:$0xff] %vm429, %v419
  %453 = vst.msk [vmem:[%s2 + $0xb8] sm:$0xff] %vm429, %v420
  %454 = vst.msk [vmem:[%s2 + $0xc0] sm:$0xff] %vm429, %v421
  %455 = vst.msk [vmem:[%s2 + $0xc8] sm:$0xff] %vm429, %v422
  %456 = vst.msk [vmem:[%s2 + $0xd0] sm:$0xff] %vm429, %v423
  %457 = vst.msk [vmem:[%s2 + $0xd8] sm:$0xff] %vm429, %v424
  %458 = vst.msk [vmem:[%s2 + $0xe0] sm:$0xff] %vm429, %v425
  %459 = vst.msk [vmem:[%s2 + $0xe8] sm:$0xff] %vm429, %v426
  %460 = vst.msk [vmem:[%s2 + $0xf0] sm:$0xff] %vm429, %v427
  %461 = vst.msk [vmem:[%s2 + $0xf8] sm:$0xff] %vm429, %v428
  // Predicated region
  $region10: #{tpu_custom_call.1} parent=0 // pred_check
    _
  $region11: #{tpu_custom_call.1} parent=0 // pred_check_branch
    %463 = sbr.rel (0) target = $region13
  $region12: #{tpu_custom_call.1} parent=0 // pred_region
    _
  $region13: #{tpu_custom_call.1} parent=0 // pred_fallthru
    _
  // Predicated region
  $region14: #{tpu_custom_call.1} parent=0 // pred_check
    _
  $region15: #{tpu_custom_call.1} parent=0 // pred_check_branch
    %465 = sbr.rel (0) target = $region17
  $region16: #{tpu_custom_call.1} parent=0 // pred_region
    _
  $region17: #{tpu_custom_call.1} parent=0 // pred_fallthru
    _

// kernel: tpu_custom_call.1
$region0: #{tpu_custom_call.1}
  #allocation0 [shape = 'u32[]', space=smem, size = 0x4, offset = 0x4, fixed_abs, tag = 'smem constant byte address 0x4 - core index']
  #allocation1 [shape = 'u32[144,128]{1,0:T(1,128)}', space=vmem, size = 0x12000, scoped, tag = 'internal scratch']
  %s0 = inlined_call_operand.vmem [shape: f32[256,32], index: 0, kind: input, shape index: {}]
  %s1 = inlined_call_operand.vmem [shape: f32[64,32], index: 1, kind: input, shape index: {}]
  %s2 = inlined_call_operand.vmem [shape: f32[256,64], index: 2, kind: output, shape index: {}]
  %s3 = sld [smem:[#allocation0]]
  $region18: #{tpu_custom_call.1} parent=0
    _
  %s5 = ssub.s32 1, %s3
  %s6 = scalar_select 0, %s5, %s3
  // Predicated region
  $region2: #{tpu_custom_call.1} parent=0 // pred_check
    _
  $region3: #{tpu_custom_call.1} parent=0 // pred_check_branch
    %8 = sbr.rel (0) target = $region5
  $region4: #{tpu_custom_call.1} parent=0 // pred_region
    _
  $region5: #{tpu_custom_call.1} parent=0 // pred_fallthru
    _
  // Predicated region
  $region6: #{tpu_custom_call.1} parent=0 // pred_check
    _
  $region7: #{tpu_custom_call.1} parent=0 // pred_check_branch
    %10 = sbr.rel (0) target = $region9
  $region8: #{tpu_custom_call.1} parent=0 // pred_region
    _
  $region9: #{tpu_custom_call.1} parent=0 // pred_fallthru
    _
  %v11 = vld [vmem:[%s0] sm:$0xff]
  %v12 = vld [vmem:[%s0 + $0x8] sm:$0xff]
  %v13 = vld [vmem:[%s0 + $0x10] sm:$0xff]
  %v14 = vld [vmem:[%s0 + $0x18] sm:$0xff]
  %v15 = vld [vmem:[%s0 + $0x20] sm:$0xff]
  %v16 = vld [vmem:[%s0 + $0x28] sm:$0xff]
  %v17 = vld [vmem:[%s0 + $0x30] sm:$0xff]
  %v18 = vld [vmem:[%s0 + $0x38] sm:$0xff]
  %v19 = vld [vmem:[%s0 + $0x40] sm:$0xff]
  %v20 = vld [vmem:[%s0 + $0x48] sm:$0xff]
  %v21 = vld [vmem:[%s0 + $0x50] sm:$0xff]
  %v22 = vld [vmem:[%s0 + $0x58] sm:$0xff]
  %v23 = vld [vmem:[%s0 + $0x60] sm:$0xff]
  %v24 = vld [vmem:[%s0 + $0x68] sm:$0xff]
  %v25 = vld [vmem:[%s0 + $0x70] sm:$0xff]
  %v26 = vld [vmem:[%s0 + $0x78] sm:$0xff]
  %v27 = vld [vmem:[%s0 + $0x80] sm:$0xff]
  %v28 = vld [vmem:[%s0 + $0x88] sm:$0xff]
  %v29 = vld [vmem:[%s0 + $0x90] sm:$0xff]
  %v30 = vld [vmem:[%s0 + $0x98] sm:$0xff]
  %v31 = vld [vmem:[%s0 + $0xa0] sm:$0xff]
  %v32 = vld [vmem:[%s0 + $0xa8] sm:$0xff]
  %v33 = vld [vmem:[%s0 + $0xb0] sm:$0xff]
  %v34 = vld [vmem:[%s0 + $0xb8] sm:$0xff]
  %v35 = vld [vmem:[%s0 + $0xc0] sm:$0xff]
  %v36 = vld [vmem:[%s0 + $0xc8] sm:$0xff]
  %v37 = vld [vmem:[%s0 + $0xd0] sm:$0xff]
  %v38 = vld [vmem:[%s0 + $0xd8] sm:$0xff]
  %v39 = vld [vmem:[%s0 + $0xe0] sm:$0xff]
  %v40 = vld [vmem:[%s0 + $0xe8] sm:$0xff]
  %v41 = vld [vmem:[%s0 + $0xf0] sm:$0xff]
  %v42 = vld [vmem:[%s0 + $0xf8] sm:$0xff]
  %v43 = vld [vmem:[%s1] sm:$0xff]
  %v44 = vld [vmem:[%s1 + $0x8] sm:$0xff]
  %v45 = vld [vmem:[%s1 + $0x10] sm:$0xff]
  %v46 = vld [vmem:[%s1 + $0x18] sm:$0xff]
  %v47 = vld [vmem:[%s1 + $0x20] sm:$0xff]
  %v48 = vld [vmem:[%s1 + $0x28] sm:$0xff]
  %v49 = vld [vmem:[%s1 + $0x30] sm:$0xff]
  %v50 = vld [vmem:[%s1 + $0x38] sm:$0xff]
  %vm51 = vcmask 261120
  %v53 = vsel %vm51, %v11, 0
  %v56 = vsel %vm51, %v12, 0
  %v59 = vsel %vm51, %v13, 0
  %v62 = vsel %vm51, %v14, 0
  %v65 = vsel %vm51, %v15, 0
  %v68 = vsel %vm51, %v16, 0
  %v71 = vsel %vm51, %v17, 0
  %v74 = vsel %vm51, %v18, 0
  %v77 = vsel %vm51, %v19, 0
  %v80 = vsel %vm51, %v20, 0
  %v83 = vsel %vm51, %v21, 0
  %v86 = vsel %vm51, %v22, 0
  %v89 = vsel %vm51, %v23, 0
  %v92 = vsel %vm51, %v24, 0
  %v95 = vsel %vm51, %v25, 0
  %v98 = vsel %vm51, %v26, 0
  %v101 = vsel %vm51, %v27, 0
  %v104 = vsel %vm51, %v28, 0
  %v107 = vsel %vm51, %v29, 0
  %v110 = vsel %vm51, %v30, 0
  %v113 = vsel %vm51, %v31, 0
  %v116 = vsel %vm51, %v32, 0
  %v119 = vsel %vm51, %v33, 0
  %v122 = vsel %vm51, %v34, 0
  %v125 = vsel %vm51, %v35, 0
  %v128 = vsel %vm51, %v36, 0
  %v131 = vsel %vm51, %v37, 0
  %v134 = vsel %vm51, %v38, 0
  %v137 = vsel %vm51, %v39, 0
  %v140 = vsel %vm51, %v40, 0
  %v143 = vsel %vm51, %v41, 0
  %v146 = vsel %vm51, %v42, 0
  %v149 = vsel %vm51, %v43, 0
  %v152 = vsel %vm51, %v44, 0
  %v155 = vsel %vm51, %v45, 0
  %v158 = vsel %vm51, %v46, 0
  %v161 = vsel %vm51, %v47, 0
  %v164 = vsel %vm51, %v48, 0
  %v167 = vsel %vm51, %v49, 0
  %v170 = vsel %vm51, %v50, 0
  %172 = vmatprep.subr.mxu0 0.0
  %173 = vmatpush1.xpose.msra.mxu0 %v149
  %174 = vmatprep.subr.mxu0 0.0
  %175 = vmatpush1.xpose.msra.mxu0 %v152
  %176 = vmatprep.subr.mxu0 0.0
  %177 = vmatpush1.xpose.msra.mxu0 %v155
  %178 = vmatprep.subr.mxu0 0.0
  %179 = vmatpush1.xpose.msra.mxu0 %v158
  %180 = vmatprep.subr.mxu0 0.0
  %181 = vmatpush1.xpose.msra.mxu0 %v161
  %182 = vmatprep.subr.mxu0 0.0
  %183 = vmatpush1.xpose.msra.mxu0 %v164
  %184 = vmatprep.subr.mxu0 0.0
  %185 = vmatpush1.xpose.msra.mxu0 %v167
  %186 = vmatprep.subr.mxu0 0.0
  %187 = vmatpush1.xpose.msra.mxu0 %v170
  %188 = vmatprep.subr.mxu0 0.0
  %189 = vmatpush1.xpose.msra.mxu0 0.0
  %190 = vmatprep.subr.mxu0 0.0
  %191 = vmatpush1.xpose.msra.mxu0 0.0
  %192 = vmatprep.subr.mxu0 0.0
  %193 = vmatpush1.xpose.msra.mxu0 0.0
  %194 = vmatprep.subr.mxu0 0.0
  %195 = vmatpush1.xpose.msra.mxu0 0.0
  %196 = vmatprep.subr.mxu0 0.0
  %197 = vmatpush1.xpose.msra.mxu0 0.0
  %198 = vmatprep.subr.mxu0 0.0
  %199 = vmatpush1.xpose.msra.mxu0 0.0
  %200 = vmatprep.subr.mxu0 0.0
  %201 = vmatpush1.xpose.msra.mxu0 0.0
  %202 = vmatprep.subr.mxu0 0.0
  %203 = vmatpush1.xpose.msra.mxu0 0.0
  %204 = vmatprep.subr.mxu0 0.0
  %205 = vmatpush1.xpose.msra.mxu0 0.0
  %206 = vmatprep.subr.mxu0 0.0
  %207 = vmatpush1.xpose.msra.mxu0 0.0
  %208 = vmatprep.subr.mxu0 0.0
  %209 = vmatpush1.xpose.msra.mxu0 0.0
  %210 = vmatprep.subr.mxu0 0.0
  %211 = vmatpush1.xpose.msra.mxu0 0.0
  %212 = vmatprep.subr.mxu0 0.0
  %213 = vmatpush1.xpose.msra.mxu0 0.0
  %214 = vmatprep.subr.mxu0 0.0
  %215 = vmatpush1.xpose.msra.mxu0 0.0
  %216 = vmatprep.subr.mxu0 0.0
  %217 = vmatpush1.xpose.msra.mxu0 0.0
  %218 = vmatprep.subr.mxu0 0.0
  %219 = vmatpush1.xpose.msra.mxu0 0.0
  %220 = vmatprep.subr.mxu0 0.0
  %221 = vmatpush1.xpose.msra.mxu0 0.0
  %222 = vmatprep.subr.mxu0 0.0
  %223 = vmatpush1.xpose.msra.mxu0 0.0
  %224 = vmatprep.subr.mxu0 0.0
  %225 = vmatpush1.xpose.msra.mxu0 0.0
  %226 = vmatprep.subr.mxu0 0.0
  %227 = vmatpush1.xpose.msra.mxu0 0.0
  %228 = vmatprep.subr.mxu0 0.0
  %229 = vmatpush1.xpose.msra.mxu0 0.0
  %230 = vmatprep.subr.mxu0 0.0
  %231 = vmatpush1.xpose.msra.mxu0 0.0
  %232 = vmatprep.subr.mxu0 0.0
  %233 = vmatpush1.xpose.msra.mxu0 0.0
  %234 = vmatprep.subr.mxu0 0.0
  %235 = vmatpush1.xpose.msra.mxu0 0.0
  %236 = vmatprep.mubr.f32.mxu0 0.0
  %237 = vmatmul.mubr.f32.gmra.mrb[0].mxu0 %v53
  %v238 = vpop.f32.mrb[0].mxu0
  %v239 = vadd.f32 0.0, %v238
  %v240 = vpop.f32.mrb[0].mxu0
  %241 = vmatprep.mubr.f32.mxu0 0.0
  %242 = vmatmul.mubr.f32.gmra.mrb[0].mxu0 %v56
  %v243 = vpop.f32.mrb[0].mxu0
  %v244 = vadd.f32 0.0, %v243
  %v245 = vpop.f32.mrb[0].mxu0
  %246 = vmatprep.mubr.f32.mxu0 0.0
  %247 = vmatmul.mubr.f32.gmra.mrb[0].mxu0 %v59
  %v248 = vpop.f32.mrb[0].mxu0
  %v249 = vadd.f32 0.0, %v248
  %v250 = vpop.f32.mrb[0].mxu0
  %251 = vmatprep.mubr.f32.mxu0 0.0
  %252 = vmatmul.mubr.f32.gmra.mrb[0].mxu0 %v62
  %v253 = vpop.f32.mrb[0].mxu0
  %v254 = vadd.f32 0.0, %v253
  %v255 = vpop.f32.mrb[0].mxu0
  %256 = vmatprep.mubr.f32.mxu0 0.0
  %257 = vmatmul.mubr.f32.gmra.mrb[0].mxu0 %v65
  %v258 = vpop.f32.mrb[0].mxu0
  %v259 = vadd.f32 0.0, %v258
  %v260 = vpop.f32.mrb[0].mxu0
  %261 = vmatprep.mubr.f32.mxu0 0.0
  %262 = vmatmul.mubr.f32.gmra.mrb[0].mxu0 %v68
  %v263 = vpop.f32.mrb[0].mxu0
  %v264 = vadd.f32 0.0, %v263
  %v265 = vpop.f32.mrb[0].mxu0
  %266 = vmatprep.mubr.f32.mxu0 0.0
  %267 = vmatmul.mubr.f32.gmra.mrb[0].mxu0 %v71
  %v268 = vpop.f32.mrb[0].mxu0
  %v269 = vadd.f32 0.0, %v268
  %v270 = vpop.f32.mrb[0].mxu0
  %271 = vmatprep.mubr.f32.mxu0 0.0
  %272 = vmatmul.mubr.f32.gmra.mrb[0].mxu0 %v74
  %v273 = vpop.f32.mrb[0].mxu0
  %v274 = vadd.f32 0.0, %v273
  %v275 = vpop.f32.mrb[0].mxu0
  %276 = vmatprep.mubr.f32.mxu0 0.0
  %277 = vmatmul.mubr.f32.gmra.mrb[0].mxu0 %v77
  %v278 = vpop.f32.mrb[0].mxu0
  %v279 = vadd.f32 0.0, %v278
  %v280 = vpop.f32.mrb[0].mxu0
  %281 = vmatprep.mubr.f32.mxu0 0.0
  %282 = vmatmul.mubr.f32.gmra.mrb[0].mxu0 %v80
  %v283 = vpop.f32.mrb[0].mxu0
  %v284 = vadd.f32 0.0, %v283
  %v285 = vpop.f32.mrb[0].mxu0
  %286 = vmatprep.mubr.f32.mxu0 0.0
  %287 = vmatmul.mubr.f32.gmra.mrb[0].mxu0 %v83
  %v288 = vpop.f32.mrb[0].mxu0
  %v289 = vadd.f32 0.0, %v288
  %v290 = vpop.f32.mrb[0].mxu0
  %291 = vmatprep.mubr.f32.mxu0 0.0
  %292 = vmatmul.mubr.f32.gmra.mrb[0].mxu0 %v86
  %v293 = vpop.f32.mrb[0].mxu0
  %v294 = vadd.f32 0.0, %v293
  %v295 = vpop.f32.mrb[0].mxu0
  %296 = vmatprep.mubr.f32.mxu0 0.0
  %297 = vmatmul.mubr.f32.gmra.mrb[0].mxu0 %v89
  %v298 = vpop.f32.mrb[0].mxu0
  %v299 = vadd.f32 0.0, %v298
  %v300 = vpop.f32.mrb[0].mxu0
  %301 = vmatprep.mubr.f32.mxu0 0.0
  %302 = vmatmul.mubr.f32.gmra.mrb[0].mxu0 %v92
  %v303 = vpop.f32.mrb[0].mxu0
  %v304 = vadd.f32 0.0, %v303
  %v305 = vpop.f32.mrb[0].mxu0
  %306 = vmatprep.mubr.f32.mxu0 0.0
  %307 = vmatmul.mubr.f32.gmra.mrb[0].mxu0 %v95
  %v308 = vpop.f32.mrb[0].mxu0
  %v309 = vadd.f32 0.0, %v308
  %v310 = vpop.f32.mrb[0].mxu0
  %311 = vmatprep.mubr.f32.mxu0 0.0
  %312 = vmatmul.mubr.f32.gmra.mrb[0].mxu0 %v98
  %v313 = vpop.f32.mrb[0].mxu0
  %v314 = vadd.f32 0.0, %v313
  %v315 = vpop.f32.mrb[0].mxu0
  %316 = vmatprep.mubr.f32.mxu0 0.0
  %317 = vmatmul.mubr.f32.gmra.mrb[0].mxu0 %v101
  %v318 = vpop.f32.mrb[0].mxu0
  %v319 = vadd.f32 0.0, %v318
  %v320 = vpop.f32.mrb[0].mxu0
  %321 = vmatprep.mubr.f32.mxu0 0.0
  %322 = vmatmul.mubr.f32.gmra.mrb[0].mxu0 %v104
  %v323 = vpop.f32.mrb[0].mxu0
  %v324 = vadd.f32 0.0, %v323
  %v325 = vpop.f32.mrb[0].mxu0
  %326 = vmatprep.mubr.f32.mxu0 0.0
  %327 = vmatmul.mubr.f32.gmra.mrb[0].mxu0 %v107
  %v328 = vpop.f32.mrb[0].mxu0
  %v329 = vadd.f32 0.0, %v328
  %v330 = vpop.f32.mrb[0].mxu0
  %331 = vmatprep.mubr.f32.mxu0 0.0
  %332 = vmatmul.mubr.f32.gmra.mrb[0].mxu0 %v110
  %v333 = vpop.f32.mrb[0].mxu0
  %v334 = vadd.f32 0.0, %v333
  %v335 = vpop.f32.mrb[0].mxu0
  %336 = vmatprep.mubr.f32.mxu0 0.0
  %337 = vmatmul.mubr.f32.gmra.mrb[0].mxu0 %v113
  %v338 = vpop.f32.mrb[0].mxu0
  %v339 = vadd.f32 0.0, %v338
  %v340 = vpop.f32.mrb[0].mxu0
  %341 = vmatprep.mubr.f32.mxu0 0.0
  %342 = vmatmul.mubr.f32.gmra.mrb[0].mxu0 %v116
  %v343 = vpop.f32.mrb[0].mxu0
  %v344 = vadd.f32 0.0, %v343
  %v345 = vpop.f32.mrb[0].mxu0
  %346 = vmatprep.mubr.f32.mxu0 0.0
  %347 = vmatmul.mubr.f32.gmra.mrb[0].mxu0 %v119
  %v348 = vpop.f32.mrb[0].mxu0
  %v349 = vadd.f32 0.0, %v348
  %v350 = vpop.f32.mrb[0].mxu0
  %351 = vmatprep.mubr.f32.mxu0 0.0
  %352 = vmatmul.mubr.f32.gmra.mrb[0].mxu0 %v122
  %v353 = vpop.f32.mrb[0].mxu0
  %v354 = vadd.f32 0.0, %v353
  %v355 = vpop.f32.mrb[0].mxu0
  %356 = vmatprep.mubr.f32.mxu0 0.0
  %357 = vmatmul.mubr.f32.gmra.mrb[0].mxu0 %v125
  %v358 = vpop.f32.mrb[0].mxu0
  %v359 = vadd.f32 0.0, %v358
  %v360 = vpop.f32.mrb[0].mxu0
  %361 = vmatprep.mubr.f32.mxu0 0.0
  %362 = vmatmul.mubr.f32.gmra.mrb[0].mxu0 %v128
  %v363 = vpop.f32.mrb[0].mxu0
  %v364 = vadd.f32 0.0, %v363
  %v365 = vpop.f32.mrb[0].mxu0
  %366 = vmatprep.mubr.f32.mxu0 0.0
  %367 = vmatmul.mubr.f32.gmra.mrb[0].mxu0 %v131
  %v368 = vpop.f32.mrb[0].mxu0
  %v369 = vadd.f32 0.0, %v368
  %v370 = vpop.f32.mrb[0].mxu0
  %371 = vmatprep.mubr.f32.mxu0 0.0
  %372 = vmatmul.mubr.f32.gmra.mrb[0].mxu0 %v134
  %v373 = vpop.f32.mrb[0].mxu0
  %v374 = vadd.f32 0.0, %v373
  %v375 = vpop.f32.mrb[0].mxu0
  %376 = vmatprep.mubr.f32.mxu0 0.0
  %377 = vmatmul.mubr.f32.gmra.mrb[0].mxu0 %v137
  %v378 = vpop.f32.mrb[0].mxu0
  %v379 = vadd.f32 0.0, %v378
  %v380 = vpop.f32.mrb[0].mxu0
  %381 = vmatprep.mubr.f32.mxu0 0.0
  %382 = vmatmul.mubr.f32.gmra.mrb[0].mxu0 %v140
  %v383 = vpop.f32.mrb[0].mxu0
  %v384 = vadd.f32 0.0, %v383
  %v385 = vpop.f32.mrb[0].mxu0
  %386 = vmatprep.mubr.f32.mxu0 0.0
  %387 = vmatmul.mubr.f32.gmra.mrb[0].mxu0 %v143
  %v388 = vpop.f32.mrb[0].mxu0
  %v389 = vadd.f32 0.0, %v388
  %v390 = vpop.f32.mrb[0].mxu0
  %391 = vmatprep.mubr.f32.mxu0 0.0
  %392 = vmatmul.mubr.f32.gmra.mrb[0].mxu0 %v146
  %v393 = vpop.f32.mrb[0].mxu0
  %v394 = vadd.f32 0.0, %v393
  %v395 = vpop.f32.mrb[0].mxu0
  %396 = vdwg.mxu0
  %v397 = vmul.f32 %v239, 0.125
  %v398 = vmul.f32 %v244, 0.125
  %v399 = vmul.f32 %v249, 0.125
  %v400 = vmul.f32 %v254, 0.125
  %v401 = vmul.f32 %v259, 0.125
  %v402 = vmul.f32 %v264, 0.125
  %v403 = vmul.f32 %v269, 0.125
  %v404 = vmul.f32 %v274, 0.125
  %v405 = vmul.f32 %v279, 0.125
  %v406 = vmul.f32 %v284, 0.125
  %v407 = vmul.f32 %v289, 0.125
  %v408 = vmul.f32 %v294, 0.125
  %v409 = vmul.f32 %v299, 0.125
  %v410 = vmul.f32 %v304, 0.125
  %v411 = vmul.f32 %v309, 0.125
  %v412 = vmul.f32 %v314, 0.125
  %v413 = vmul.f32 %v319, 0.125
  %v414 = vmul.f32 %v324, 0.125
  %v415 = vmul.f32 %v329, 0.125
  %v416 = vmul.f32 %v334, 0.125
  %v417 = vmul.f32 %v339, 0.125
  %v418 = vmul.f32 %v344, 0.125
  %v419 = vmul.f32 %v349, 0.125
  %v420 = vmul.f32 %v354, 0.125
  %v421 = vmul.f32 %v359, 0.125
  %v422 = vmul.f32 %v364, 0.125
  %v423 = vmul.f32 %v369, 0.125
  %v424 = vmul.f32 %v374, 0.125
  %v425 = vmul.f32 %v379, 0.125
  %v426 = vmul.f32 %v384, 0.125
  %v427 = vmul.f32 %v389, 0.125
  %v428 = vmul.f32 %v394, 0.125
  %vm429 = vcmask 523264
  %430 = vst.msk [vmem:[%s2] sm:$0xff] %vm429, %v397
  %431 = vst.msk [vmem:[%s2 + $0x8] sm:$0xff] %vm429, %v398
  %432 = vst.msk [vmem:[%s2 + $0x10] sm:$0xff] %vm429, %v399
  %433 = vst.msk [vmem:[%s2 + $0x18] sm:$0xff] %vm429, %v400
  %434 = vst.msk [vmem:[%s2 + $0x20] sm:$0xff] %vm429, %v401
  %435 = vst.msk [vmem:[%s2 + $0x28] sm:$0xff] %vm429, %v402
  %436 = vst.msk [vmem:[%s2 + $0x30] sm:$0xff] %vm429, %v403
  %437 = vst.msk [vmem:[%s2 + $0x38] sm:$0xff] %vm429, %v404
  %438 = vst.msk [vmem:[%s2 + $0x40] sm:$0xff] %vm429, %v405
  %439 = vst.msk [vmem:[%s2 + $0x48] sm:$0xff] %vm429, %v406
  %440 = vst.msk [vmem:[%s2 + $0x50] sm:$0xff] %vm429, %v407
  %441 = vst.msk [vmem:[%s2 + $0x58] sm:$0xff] %vm429, %v408
  %442 = vst.msk [vmem:[%s2 + $0x60] sm:$0xff] %vm429, %v409
  %443 = vst.msk [vmem:[%s2 + $0x68] sm:$0xff] %vm429, %v410
  %444 = vst.msk [vmem:[%s2 + $0x70] sm:$0xff] %vm429, %v411
  %445 = vst.msk [vmem:[%s2 + $0x78] sm:$0xff] %vm429, %v412
  %446 = vst.msk [vmem:[%s2 + $0x80] sm:$0xff] %vm429, %v413
  %447 = vst.msk [vmem:[%s2 + $0x88] sm:$0xff] %vm429, %v414
  %448 = vst.msk [vmem:[%s2 + $0x90] sm:$0xff] %vm429, %v415
  %449 = vst.msk [vmem:[%s2 + $0x98] sm:$0xff] %vm429, %v416
  %450 = vst.msk [vmem:[%s2 + $0xa0] sm:$0xff] %vm429, %v417
  %451 = vst.msk [vmem:[%s2 + $0xa8] sm:$0xff] %vm429, %v418
  %452 = vst.msk [vmem:[%s2 + $0xb0] sm:$0xff] %vm429, %v419
  %453 = vst.msk [vmem:[%s2 + $0xb8] sm:$0xff] %vm429, %v420
  %454 = vst.msk [vmem:[%s2 + $0xc0] sm:$0xff] %vm429, %v421
  %455 = vst.msk [vmem:[%s2 + $0xc8] sm:$0xff] %vm429, %v422
  %456 = vst.msk [vmem:[%s2 + $0xd0] sm:$0xff] %vm429, %v423
  %457 = vst.msk [vmem:[%s2 + $0xd8] sm:$0xff] %vm429, %v424
  %458 = vst.msk [vmem:[%s2 + $0xe0] sm:$0xff] %vm429, %v425
  %459 = vst.msk [vmem:[%s2 + $0xe8] sm:$0xff] %vm429, %v426
  %460 = vst.msk [vmem:[%s2 + $0xf0] sm:$0xff] %vm429, %v427
  %461 = vst.msk [vmem:[%s2 + $0xf8] sm:$0xff] %vm429, %v428
  // Predicated region
  $region10: #{tpu_custom_call.1} parent=0 // pred_check
    _
  $region11: #{tpu_custom_call.1} parent=0 // pred_check_branch
    %463 = sbr.rel (0) target = $region13
  $region12: #{tpu_custom_call.1} parent=0 // pred_region
    _
  $region13: #{tpu_custom_call.1} parent=0 // pred_fallthru
    _
  // Predicated region
  $region14: #{tpu_custom_call.1} parent=0 // pred_check
    _
  $region15: #{tpu_custom_call.1} parent=0 // pred_check_branch
    %465 = sbr.rel (0) target = $region17
  $region16: #{tpu_custom_call.1} parent=0 // pred_region
    _
  $region17: #{tpu_custom_call.1} parent=0 // pred_fallthru
    _

</llo_original>
